<compile_context>
chip_gen: v5e
topology: v5e:2x2
jax: 0.10.0
libtpu: 0.0.40
codegen_flags: <defaults>
</compile_context>

<pallas_src>
import jax
import jax.numpy as jnp
from jax.experimental import pallas as pl
from jax.experimental.pallas import tpu as pltpu

D_CLIP = 512
D_VIT = 768


# --------------------------------------------------------------------------
# Kernels: streamed partial sum of vit_hidden over (layers, sequence).
# Grid = (P, L_range, S_chunk_range); axis 0 is the core-parallel split,
# axes 1/2 are reduction axes.  Output block (B, 768) f32 stays resident per p.
# --------------------------------------------------------------------------
def _vit_sum_kernel_mxu(sel_ref, vit_ref, out_ref):
    """MXU reduction: out[b,d] += sum_s tile[b,s,d] via selector matmul."""
    l = pl.program_id(1)
    s = pl.program_id(2)

    @pl.when((l == 0) & (s == 0))
    def _init():
        out_ref[...] = jnp.zeros_like(out_ref)

    tile = vit_ref[...]                              # (B, s_chunk, 768), stream dtype
    b, sc, d = tile.shape
    # s_chunk is sublane-pack aligned on this path -> layout no-op collapse.
    tile2d = tile.reshape(b * sc, d)                 # (B*s_chunk, 768)
    out_ref[...] += jnp.dot(sel_ref[...], tile2d,
                            preferred_element_type=jnp.float32)


def _vit_sum_kernel_vpu(vit_ref, out_ref):
    """Fallback for non-pack-aligned s_chunk: f32 VPU reduce (known good)."""
    l = pl.program_id(1)
    s = pl.program_id(2)

    @pl.when((l == 0) & (s == 0))
    def _init():
        out_ref[...] = jnp.zeros_like(out_ref)

    out_ref[...] += jnp.sum(vit_ref[...].astype(jnp.float32), axis=1)


# --------------------------------------------------------------------------
# Sizing helpers (generation-aware).
# --------------------------------------------------------------------------
def _vmem_capacity_bytes():
    try:
        return int(pltpu.get_tpu_info().vmem_capacity_bytes)
    except Exception:
        return 64 * 1024 * 1024      # conservative: v7x per-core VMEM


def _sublane_pack(itemsize):
    return {4: 8, 2: 16, 1: 32}.get(int(itemsize), 8)


def _pick_s_chunk(seq_len, bsz, itemsize, tile_budget_bytes):
    """Largest S chunk that divides S, is pack-aligned, and fits the budget."""
    pack = _sublane_pack(itemsize)
    row_bytes = bsz * D_VIT * itemsize
    max_rows = max(pack, tile_budget_bytes // row_bytes)
    if seq_len <= max_rows:
        return seq_len                               # full dim always legal
    for c in range(int(max_rows), pack - 1, -1):
        if seq_len % c == 0 and c % pack == 0:
            return c
    return seq_len                                   # fallback: full S


# --------------------------------------------------------------------------
# Wrapper: Pallas streaming reduce + plain-XLA epilogue (per perf review).
# --------------------------------------------------------------------------
def process_visual_features(clip_embeds, vit_hidden, params):
    """clip_embeds: (B, 512); vit_hidden: (L, B, S, 768).  Returns (B, 1, H)."""
    B, dc = clip_embeds.shape
    L, Bv, S, Dv = vit_hidden.shape
    assert dc == D_CLIP and Dv == D_VIT and Bv == B
    out_dtype = clip_embeds.dtype

    itemsize = int(jnp.dtype(vit_hidden.dtype).itemsize)
    capacity = _vmem_capacity_bytes()
    tile_budget = max(1 << 20, capacity // 8)        # ~2-3 buffers <= 3/8 VMEM
    s_chunk = _pick_s_chunk(S, B, itemsize, tile_budget)
    n_s = S // s_chunk
    pack = _sublane_pack(itemsize)
    use_mxu = (s_chunk % pack == 0)

    # Dual-TensorCore split (v7x): leading parallel axis over S-chunks or L.
    if n_s % 2 == 0:
        P, l_per, n_sp = 2, L, n_s // 2
        vit_map = lambda p, l, s, _o=n_sp: (l, 0, p * _o + s, 0)
    elif L % 2 == 0:
        P, l_per, n_sp = 2, L // 2, n_s
        vit_map = lambda p, l, s, _o=L // 2: (p * _o + l, 0, s, 0)
    else:
        P, l_per, n_sp = 1, L, n_s
        vit_map = lambda p, l, s: (l, 0, s, 0)
    grid = (P, l_per, n_sp)

    vit_spec = pl.BlockSpec((pl.Squeezed(), B, s_chunk, Dv), vit_map)
    out_spec = pl.BlockSpec((pl.Squeezed(), B, Dv), lambda p, l, s: (p, 0, 0))
    out_shape = jax.ShapeDtypeStruct((P, B, Dv), jnp.float32)

    vit_block_bytes = B * s_chunk * Dv * itemsize
    out_block_bytes = B * Dv * 4

    if use_mxu:
        # Selector matrix E[b, b*s_chunk + s] = 1 -> (E @ tile2d)[b] = sum_s tile[b,s].
        sel = ((jnp.arange(B * s_chunk, dtype=jnp.int32) // s_chunk)[None, :]
               == jnp.arange(B, dtype=jnp.int32)[:, None]).astype(vit_hidden.dtype)
        sel_spec = pl.BlockSpec(sel.shape, lambda p, l, s: (0, 0))
        kernel, inputs, in_specs = _vit_sum_kernel_mxu, (sel, vit_hidden), [sel_spec, vit_spec]
        sel_bytes = int(sel.size) * itemsize
    else:
        kernel, inputs, in_specs = _vit_sum_kernel_vpu, (vit_hidden,), [vit_spec]
        sel_bytes = 0

    # VMEM estimate: double-buffered vit tile + (tiny) resident selector + output
    # block, plus slack.  Clamped to the per-generation physical capacity.
    needed = 2 * vit_block_bytes + 2 * sel_bytes + 2 * out_block_bytes + (2 << 20)
    vmem_limit = int(min(max(needed, 16 * 1024 * 1024), capacity - (2 << 20)))

    flops = 2 * L * B * S * Dv
    bytes_accessed = int(vit_hidden.size) * itemsize + sel_bytes + P * B * Dv * 4

    partials = pl.pallas_call(
        kernel,
        out_shape=out_shape,
        grid_spec=pltpu.PrefetchScalarGridSpec(
            num_scalar_prefetch=0,
            grid=grid,
            in_specs=in_specs,
            out_specs=out_spec,
        ),
        compiler_params=pltpu.CompilerParams(
            dimension_semantics=("parallel", "arbitrary", "arbitrary"),
            vmem_limit_bytes=vmem_limit,
        ),
        cost_estimate=pl.CostEstimate(
            flops=int(flops), transcendentals=0, bytes_accessed=int(bytes_accessed)),
    )(*inputs)

    # ---- Epilogue (few hundred KFLOPs): plain XLA, hoisted out of the kernel
    # per the performance review so no projection/MLP weights live in VMEM. ----
    vit_e = jnp.sum(partials, axis=0) * (1.0 / float(L * S))      # (B, 768) f32
    f32 = jnp.float32
    pc = clip_embeds.astype(f32) @ params["wc"].astype(f32) + params["bc"].astype(f32)[0]
    pv = vit_e @ params["wv"].astype(f32) + params["bv"].astype(f32)[0]
    combined = jnp.concatenate([pc, pv], axis=-1)
    h = jnp.maximum(combined @ params["w1"].astype(f32) + params["b1"].astype(f32)[0], 0.0)
    fused = h @ params["w2"].astype(f32) + params["b2"].astype(f32)[0]
    return fused.astype(out_dtype)[:, None, :]                    # unsqueeze(1)


# --------------------------------------------------------------------------
# Pure-JAX reference and synthetic parameters.
# --------------------------------------------------------------------------
def _reference(clip_embeds, vit_hidden_f32, params):
    vit_e = jnp.mean(jnp.mean(vit_hidden_f32, axis=0), axis=1)
    pc = clip_embeds @ params["wc"] + params["bc"][0]
    pv = vit_e @ params["wv"] + params["bv"][0]
    combined = jnp.concatenate([pc, pv], axis=-1)
    h = jnp.maximum(combined @ params["w1"] + params["b1"][0], 0.0)
    fused = h @ params["w2"] + params["b2"][0]
    return fused[:, None, :]


def make_params(key, hidden_size, dtype=jnp.float32):
    ks = jax.random.split(key, 8)
    scale = 0.02
    return {
        "wc": (scale * jax.random.normal(ks[0], (D_CLIP, hidden_size))).astype(dtype),
        "bc": (scale * jax.random.normal(ks[1], (1, hidden_size))).astype(dtype),
        "wv": (scale * jax.random.normal(ks[2], (D_VIT, hidden_size))).astype(dtype),
        "bv": (scale * jax.random.normal(ks[3], (1, hidden_size))).astype(dtype),
        "w1": (scale * jax.random.normal(ks[4], (2 * hidden_size, hidden_size))).astype(dtype),
        "b1": (scale * jax.random.normal(ks[5], (1, hidden_size))).astype(dtype),
        "w2": (scale * jax.random.normal(ks[6], (hidden_size, hidden_size))).astype(dtype),
        "b2": (scale * jax.random.normal(ks[7], (1, hidden_size))).astype(dtype),
    }


if __name__ == "__main__":
    B = 2          # batch
    L = 4          # number of ViT hidden-state layers (incl. embedding output)
    S = 32         # ViT sequence length (small, sublane-aligned -> MXU path)
    HIDDEN = 64    # llm.config.hidden_size (small synthetic value)

    key = jax.random.PRNGKey(0)
    k_clip, k_vit, k_params = jax.random.split(key, 3)

    clip_embeds = jax.random.normal(k_clip, (B, D_CLIP), dtype=jnp.float32)
    vit_hidden = jax.random.normal(k_vit, (L, B, S, D_VIT), dtype=jnp.float32)
    params = make_params(k_params, HIDDEN, jnp.float32)

    # Stream the dominant tensor as bf16 (halves HBM bytes); math stays in f32.
    vit_hidden_bf16 = vit_hidden.astype(jnp.bfloat16)

    fused = process_visual_features(clip_embeds, vit_hidden_bf16, params)
    fused = jax.block_until_ready(fused)

    ref = _reference(clip_embeds, vit_hidden_bf16.astype(jnp.float32), params)
    assert fused.shape == (B, 1, HIDDEN), fused.shape
    assert jnp.allclose(fused, ref, atol=1e-4, rtol=1e-4), "mismatch vs reference"

    print("KERNEL_OK")
</pallas_src>

<mosaic_0001>
module attributes {stable_mosaic.version = 11 : i64} {
  func.func @_vit_sum_kernel_mxu(%arg0: i32, %arg1: i32, %arg2: i32, %arg3: memref<2x64xbf16, #tpu.memory_space<vmem>>, %arg4: memref<1x2x32x768xbf16, #tpu.memory_space<vmem>>, %arg5: memref<1x2x768xf32, #tpu.memory_space<vmem>>) attributes {dimension_semantics = [#tpu.dimension_semantics<parallel>, #tpu.dimension_semantics<arbitrary>, #tpu.dimension_semantics<arbitrary>], iteration_bounds = array<i64: 2, 2, 1>, scalar_prefetch = 0 : i64, scratch_operands = 0 : i64, tpu.core_type = #tpu.core_type<tc>, window_params = [{pipeline_mode = #tpu.pipeline_mode<synchronous>, transform_indices = @transform_0, window_bounds = array<i64: 2, 64>}, {transform_indices = @transform_1, window_bounds = array<i64: 1, 2, 32, 768>}, {transform_indices = @transform_2, window_bounds = array<i64: 1, 2, 768>}]} {
    %c0_i32 = arith.constant 0 : i32
    %0 = arith.cmpi eq, %arg1, %c0_i32 : i32
    %c0_i32_0 = arith.constant 0 : i32
    %1 = arith.cmpi eq, %arg2, %c0_i32_0 : i32
    %2 = arith.andi %0, %1 : i1
    %3 = arith.extui %2 : i1 to i32
    %c0_i32_1 = arith.constant 0 : i32
    %4 = arith.cmpi ne, %3, %c0_i32_1 : i32
    scf.if %4 {
      %cst_13 = arith.constant 0.000000e+00 : f32
      %16 = vector.broadcast %cst_13 : f32 to vector<2x768xf32>
      %c0_14 = arith.constant 0 : index
      %c0_15 = arith.constant 0 : index
      %c0_16 = arith.constant 0 : index
      %17 = vector.load %arg5[%c0_14, %c0_15, %c0_16] : memref<1x2x768xf32, #tpu.memory_space<vmem>>, vector<1x2x768xf32>
      %18 = vector.shape_cast %17 : vector<1x2x768xf32> to vector<2x768xf32>
      %19 = vector.shape_cast %16 : vector<2x768xf32> to vector<1x2x768xf32>
      tpu.vector_store %arg5[%c0_14, %c0_15, %c0_16], %19 {strides = array<i32>} : memref<1x2x768xf32, #tpu.memory_space<vmem>>, vector<1x2x768xf32>,
    } else {
    }
    %c0 = arith.constant 0 : index
    %c0_2 = arith.constant 0 : index
    %c0_3 = arith.constant 0 : index
    %c0_4 = arith.constant 0 : index
    %5 = vector.load %arg4[%c0, %c0_2, %c0_3, %c0_4] : memref<1x2x32x768xbf16, #tpu.memory_space<vmem>>, vector<1x2x32x768xbf16>
    %6 = vector.shape_cast %5 : vector<1x2x32x768xbf16> to vector<2x32x768xbf16>
    %7 = vector.shape_cast %6 : vector<2x32x768xbf16> to vector<64x768xbf16>
    %c0_5 = arith.constant 0 : index
    %c0_6 = arith.constant 0 : index
    %c0_7 = arith.constant 0 : index
    %8 = vector.load %arg5[%c0_5, %c0_6, %c0_7] : memref<1x2x768xf32, #tpu.memory_space<vmem>>, vector<1x2x768xf32>
    %9 = vector.shape_cast %8 : vector<1x2x768xf32> to vector<2x768xf32>
    %c0_8 = arith.constant 0 : index
    %c0_9 = arith.constant 0 : index
    %10 = vector.load %arg3[%c0_8, %c0_9] : memref<2x64xbf16, #tpu.memory_space<vmem>>, vector<2x64xbf16>
    %cst = arith.constant dense<0.000000e+00> : vector<2x768xf32>
    %11 = tpu.matmul %10, %7, %cst {dimension_numbers = #tpu.dot_dimension_numbers<[1], [0], [0], [1], [0, 0, 1, 1], [], []>} : vector<2x64xbf16>, vector<64x768xbf16>, vector<2x768xf32> -> vector<2x768xf32>
    %12 = arith.addf %9, %11 : vector<2x768xf32>
    %c0_10 = arith.constant 0 : index
    %c0_11 = arith.constant 0 : index
    %c0_12 = arith.constant 0 : index
    %13 = vector.load %arg5[%c0_10, %c0_11, %c0_12] : memref<1x2x768xf32, #tpu.memory_space<vmem>>, vector<1x2x768xf32>
    %14 = vector.shape_cast %13 : vector<1x2x768xf32> to vector<2x768xf32>
    %15 = vector.shape_cast %12 : vector<2x768xf32> to vector<1x2x768xf32>
    tpu.vector_store %arg5[%c0_10, %c0_11, %c0_12], %15 {strides = array<i32>} : memref<1x2x768xf32, #tpu.memory_space<vmem>>, vector<1x2x768xf32>,
    return
  }
  func.func @transform_0(%arg0: i32, %arg1: i32, %arg2: i32) -> (i32, i32) {
    %c0_i32 = arith.constant 0 : i32
    %c0_i32_0 = arith.constant 0 : i32
    %c0_i32_1 = arith.constant 0 : i32
    return %c0_i32, %c0_i32_0 : i32, i32
  }
  func.func @transform_1(%arg0: i32, %arg1: i32, %arg2: i32) -> (i32, i32, i32, i32) {
    %c2_i32 = arith.constant 2 : i32
    %0 = arith.muli %arg0, %c2_i32 : i32
    %1 = arith.addi %0, %arg1 : i32
    %c0_i32 = arith.constant 0 : i32
    %c0_i32_0 = arith.constant 0 : i32
    %c0_i32_1 = arith.constant 0 : i32
    return %1, %c0_i32, %arg2, %c0_i32_0 : i32, i32, i32, i32
  }
  func.func @transform_2(%arg0: i32, %arg1: i32, %arg2: i32) -> (i32, i32, i32) {
    %c0_i32 = arith.constant 0 : i32
    %c0_i32_0 = arith.constant 0 : i32
    %c0_i32_1 = arith.constant 0 : i32
    return %arg0, %c0_i32, %c0_i32_0 : i32, i32, i32
  }
}

</mosaic_0001>

<llo_original>
// kernel: tpu_custom_call.1
$region0: #{tpu_custom_call.1}
  #allocation0 [shape = 'u32[]', space=smem, size = 0x4, offset = 0x4, fixed_abs, tag = 'smem constant byte address 0x4 - core index']
  #allocation1 [shape = 'u32[72,128]{1,0:T(1,128)}', space=vmem, size = 0x9000, scoped, tag = 'internal scratch']
  %s0 = inlined_call_operand.hbm [shape: bf16[2,64], index: 0, kind: input, shape index: {}]
  %s1 = inlined_call_operand.hbm [shape: bf16[4,2,32,768], index: 1, kind: input, shape index: {}]
  %s2 = inlined_call_operand.hbm [shape: f32[2,2,768], index: 2, kind: output, shape index: {}]
  %s3 = sld [smem:[#allocation0]]
  $region53: #{tpu_custom_call.1} parent=0
    _
  %s5 = ssub.s32 1, %s3
  %s6 = scalar_select 0, %s5, %s3
  $region1: #{tpu_custom_call.1} parent=0
    #allocation2 [shape = 'u8[512]{0}', space=vmem, size = 0x400, scoped, tag = 'input window, operand 0, single buffered']
    #allocation3 [shape = 's32[2]{0}', space=sflag, size = 0x8, scoped, tag = 'scoped memory for tpu_custom_call.1']
    #allocation4 [shape = 's32[2]{0}', space=sflag, size = 0x8, scoped, tag = 'scoped memory for tpu_custom_call.1']
    #allocation5 [shape = 'u8[196608]{0}', space=vmem, size = 0x30000, scoped, tag = 'input window, operand 1']
    #allocation6 [shape = 's32[2]{0}', space=sflag, size = 0x8, scoped, tag = 'scoped memory for tpu_custom_call.1']
    #allocation7 [shape = 'u8[12288]{0}', space=vmem, size = 0x3000, scoped, tag = 'output window, operand 0']
    %7 = vsyncpa [#allocation3], 0
    %8 = vsyncpa [#allocation6], 0
    %s9 = scalar_lea.sflag [#allocation6], 1
    %10 = vsyncpa %s9, 0
    %11 = vsyncpa [#allocation4], 0
    %s12 = scalar_lea.sflag [#allocation4], 1
    %13 = vsyncpa %s12, 0
    loop: start=0, step=1, limit=6
    $region2: #{tpu_custom_call.1} parent=1 // loop_pre_header
      _
    $region3: #{tpu_custom_call.1} parent=1 // loop_header
      %s15 = sphi 0, %s19
      %p16 = scmp.ge.s32.totalorder %s15, 6
      %s22 = sphi 0, %s41
      %s23 = sphi 0, %s37
      %s24 = sphi 0, %s33
      %s25 = sphi 0, %s22
      %s26 = sphi 0, %s23
      %s27 = sphi 0, %s24
      %s28 = sphi 0, %s25
      %s29 = sphi 0, %s26
      %s30 = sphi 0, %s27
      %s42 = sphi 0, %s42
      %s44 = sphi 0, %s42
      %s45 = sphi 0, %s44
      %s59 = sphi 0, %s45
      %s71 = sphi 0, %s73
      %s74 = sphi 0, %s71
      %s75 = sphi 0, %s74
      %s91 = sphi 0, %s75
      %s97 = sphi 0, %s99
      %s100 = sphi 0, %s97
      %s101 = sphi 0, %s100
      %s117 = sphi 0, %s101
    $region4: #{tpu_custom_call.1} parent=1 // loop_header_branch
      %18 = sbr.rel (%p16) target = $region8
    $region5: #{tpu_custom_call.1} parent=1 // loop_body
      %s20 = ssub.s32 %s15, 1
      %s21 = ssub.s32 %s15, 2
      %s31 = sadd.s32 1, %s24
      %p32 = scmp.ge.s32.totalorder %s31, 1
      %s33 = scalar_select %p32, 0, %s31
      %s34 = sadd.s32 1, %s23
      %s35 = scalar_select %p32, %s34, %s23
      %p36 = scmp.ge.s32.totalorder %s35, 2
      %s37 = scalar_select %p36, 0, %s35
      %s38 = sadd.s32 1, %s22
      %s39 = scalar_select %p36, %s38, %s22
      %p40 = scmp.ge.s32.totalorder %s39, 2
      %s41 = scalar_select %p40, 0, %s39
      %s43 = sadd.s32 %s42, 1
      %p46 = scmp.eq.s32.totalorder %s15, 3
      %p47 = scmp.ne.s32.totalorder %s42, %s44
      %p48 = scmp.eq.s32.totalorder %s15, 0
      %p49 = por %p47, %p48
      %p50 = scmp.ne.s32.totalorder %s42, %s44
      %p51 = scmp.eq.s32.totalorder %s20, 3
      %p52 = por %p50, %p51
      %p53 = scmp.ne.s32.totalorder %s44, %s45
      %p54 = scmp.eq.s32.totalorder %s20, 0
      %p55 = por %p53, %p54
      %p56 = scmp.ne.s32.totalorder %s44, %s45
      %p57 = scmp.eq.s32.totalorder %s21, 3
      %p58 = por %p56, %p57
      %p60 = scmp.ne.s32.totalorder %s45, %s59
      %p61 = scmp.eq.s32.totalorder %s21, 0
      %p62 = por %p60, %p61
      %s63 = smul.u32 %s22, 2
      %s64 = sadd.s32 %s63, %s23
      %s65 = smul.u32 %s41, 2
      %s66 = sadd.s32 %s65, %s37
      %s67 = ssub.s32 %s64, %s66
      %s68 = ssub.s32 %s24, %s33
      %s69 = sor.u32 %s67, %s68
      %p70 = scmp.eq.s32.totalorder %s69, 0
      %s72 = sadd.s32 %s71, 1
      %s73 = scalar_select %p70, %s71, %s72
      %p76 = pneg %p70
      %p77 = scmp.eq.s32.totalorder %s15, 3
      %p78 = por %p76, %p77
      %p79 = scmp.ne.s32.totalorder %s71, %s74
      %p80 = scmp.eq.s32.totalorder %s15, 0
      %p81 = por %p79, %p80
      %p82 = scmp.ne.s32.totalorder %s71, %s74
      %p83 = scmp.eq.s32.totalorder %s20, 3
      %p84 = por %p82, %p83
      %p85 = scmp.ne.s32.totalorder %s74, %s75
      %p86 = scmp.eq.s32.totalorder %s20, 0
      %p87 = por %p85, %p86
      %p88 = scmp.ne.s32.totalorder %s74, %s75
      %p89 = scmp.eq.s32.totalorder %s21, 3
      %p90 = por %p88, %p89
      %p92 = scmp.ne.s32.totalorder %s75, %s91
      %p93 = scmp.eq.s32.totalorder %s21, 0
      %p94 = por %p92, %p93
      %s95 = ssub.s32 %s22, %s41
      %p96 = scmp.eq.s32.totalorder %s95, 0
      %s98 = sadd.s32 %s97, 1
      %s99 = scalar_select %p96, %s97, %s98
      %p102 = pneg %p96
      %p103 = scmp.eq.s32.totalorder %s15, 3
      %p104 = por %p102, %p103
      %p105 = scmp.ne.s32.totalorder %s97, %s100
      %p106 = scmp.eq.s32.totalorder %s15, 0
      %p107 = por %p105, %p106
      %p108 = scmp.ne.s32.totalorder %s97, %s100
      %p109 = scmp.eq.s32.totalorder %s20, 3
      %p110 = por %p108, %p109
      %p111 = scmp.ne.s32.totalorder %s100, %s101
      %p112 = scmp.eq.s32.totalorder %s20, 0
      %p113 = por %p111, %p112
      %p114 = scmp.ne.s32.totalorder %s100, %s101
      %p115 = scmp.eq.s32.totalorder %s21, 3
      %p116 = por %p114, %p115
      %p118 = scmp.ne.s32.totalorder %s101, %s117
      %p119 = scmp.eq.s32.totalorder %s21, 0
      %p120 = por %p118, %p119
      %p121 = scmp.le.s32.totalorder 1, %s15
      %p122 = scmp.lt.s32.totalorder %s15, 5
      %p123 = pnand %p121, %p122
      %p124 = pneg %p123
      // Predicated region
      $region9: #{tpu_custom_call.1} parent=5 // pred_check
        _
      $region10: #{tpu_custom_call.1} parent=5 // pred_check_branch
        %126 = sbr.rel (%p123) target = $region12
      $region11: #{tpu_custom_call.1} parent=5 // pred_region
        %s127 = ssub.s32 %s15, 1
        // Predicated region
        $region13: #{tpu_custom_call.1} parent=11 // pred_check
          %p128 = pneg %p55
        $region14: #{tpu_custom_call.1} parent=11 // pred_check_branch
          %130 = sbr.rel (%p128) target = $region16
        $region15: #{tpu_custom_call.1} parent=11 // pred_region
          %132 = vsyncadd [#allocation3], 0
          %s134 = sshll.u32 %s0, 4
          %s135 = int_to_ptr.hbm [resolvable:$true] %s134
          %s136 = sshll.u32 [#allocation2], 4
          %s137 = int_to_ptr.vmem [resolvable:$true] %s136
          %139 = dma.hbm_to_vmem [thread:$0]  %s135, 16, %s137, [#allocation3]
        $region16: #{tpu_custom_call.1} parent=11 // pred_fallthru
          _
      $region12: #{tpu_custom_call.1} parent=5 // pred_fallthru
        _
      %p140 = scmp.lt.s32.totalorder %s15, 4
      // Predicated region
      $region17: #{tpu_custom_call.1} parent=5 // pred_check
        %p141 = pneg %p140
      $region18: #{tpu_custom_call.1} parent=5 // pred_check_branch
        %143 = sbr.rel (%p141) target = $region20
      $region19: #{tpu_custom_call.1} parent=5 // pred_region
        // Predicated region
        $region21: #{tpu_custom_call.1} parent=19 // pred_check
          %p144 = pneg %p81
        $region22: #{tpu_custom_call.1} parent=19 // pred_check_branch
          %146 = sbr.rel (%p144) target = $region24
        $region23: #{tpu_custom_call.1} parent=19 // pred_region
          %s147 = sand.u32 %s71, 1
          %s148 = scalar_lea.sflag [#allocation6], %s147
          %s149 = sand.u32 %s71, 1
          %s150 = smul.addr %s149, 192
          %s151 = scalar_lea.vmem [#allocation5], %s150
          %s152 = smul.u32 %s22, 2
          %s153 = sadd.s32 %s152, %s23
          %s154 = smul.u32 4, %s24
          %156 = vsyncadd %s148, 0
          %s157 = smul.addr %s154, 6
          %s158 = smul.addr %s153, 48
          %s159 = sadd.s32 %s157, %s158
          %s160 = smul.addr %s159, 4
          %s161 = scalar_lea.hbm %s1, %s160
          %s162 = sshll.u32 %s161, 4
          %s163 = int_to_ptr.hbm [resolvable:$true] %s162
          %s164 = sshll.u32 %s151, 4
          %s165 = int_to_ptr.vmem [resolvable:$true] %s164
          %170 = dma.hbm_to_vmem [thread:$0]  %s163, 3072, %s165, %s148, 384, 384, 24
        $region24: #{tpu_custom_call.1} parent=19 // pred_fallthru
          _
      $region20: #{tpu_custom_call.1} parent=5 // pred_fallthru
        _
      %p171 = scmp.le.s32.totalorder 1, %s15
      %p172 = scmp.lt.s32.totalorder %s15, 5
      %p173 = pnand %p171, %p172
      %p174 = pneg %p173
      // Predicated region
      $region25: #{tpu_custom_call.1} parent=5 // pred_check
        _
      $region26: #{tpu_custom_call.1} parent=5 // pred_check_branch
        %176 = sbr.rel (%p173) target = $region28
      $region27: #{tpu_custom_call.1} parent=5 // pred_region
        %s177 = ssub.s32 %s15, 1
        // Predicated region
        $region29: #{tpu_custom_call.1} parent=27 // pred_check
          %p178 = pneg %p55
        $region30: #{tpu_custom_call.1} parent=27 // pred_check_branch
          %180 = sbr.rel (%p178) target = $region32
        $region31: #{tpu_custom_call.1} parent=27 // pred_region
          %182 = dma.done [#allocation3], 16
        $region32: #{tpu_custom_call.1} parent=27 // pred_fallthru
          _
        %s183 = sand.u32 %s74, 1
        %s184 = scalar_lea.sflag [#allocation6], %s183
        %s185 = sand.u32 %s74, 1
        %s186 = smul.addr %s185, 192
        %s187 = scalar_lea.vmem [#allocation5], %s186
        // Predicated region
        $region33: #{tpu_custom_call.1} parent=27 // pred_check
          %p188 = pneg %p87
        $region34: #{tpu_custom_call.1} parent=27 // pred_check_branch
          %190 = sbr.rel (%p188) target = $region36
        $region35: #{tpu_custom_call.1} parent=27 // pred_region
          %192 = dma.done %s184, 3072
        $region36: #{tpu_custom_call.1} parent=27 // pred_fallthru
          _
        %p193 = pneg %p55
        %p194 = pneg %p52
        %s195 = sand.u32 %s74, 1
        %s196 = scalar_lea.sflag [#allocation6], %s195
        %s197 = sand.u32 %s74, 1
        %s198 = smul.addr %s197, 192
        %s199 = scalar_lea.vmem [#allocation5], %s198
        %p200 = pneg %p87
        %p201 = pneg %p84
        %p202 = pneg %p113
        %p203 = pneg %p110
        %s204 = sand.u32 %s100, 1
        %s205 = scalar_lea.sflag [#allocation4], %s204
        %s206 = sand.u32 %s100, 1
        %s207 = smul.addr %s206, 12
        %s208 = scalar_lea.vmem [#allocation7], %s207
        %s209 = smul.u32 %s25, 2
        %s210 = sadd.s32 %s209, %s26
        %s211 = smul.u32 4, %s27
        %p213 = scmp.eq.s32.totalorder %s26, 0
        %p214 = scmp.eq.s32.totalorder %s27, 0
        %p215 = pnand %p213, %p214
        %p216 = pneg %p215
        // Predicated region
        $region37: #{tpu_custom_call.1} parent=27 // pred_check
          _
        $region38: #{tpu_custom_call.1} parent=27 // pred_check_branch
          %218 = sbr.rel (%p215) target = $region40
        $region39: #{tpu_custom_call.1} parent=27 // pred_region
          %219 = vst [vmem:[%s208] sm:$0xff] 0.0
          %220 = vst [vmem:[%s208 + $0x8] sm:$0xf] 0.0
        $region40: #{tpu_custom_call.1} parent=27 // pred_fallthru
          _
        %v221 = vld [vmem:[%s187] sm:$0xff]
        %v222 = vld [vmem:[%s187 + $0x8] sm:$0xff]
        %v223 = vld [vmem:[%s187 + $0x10] sm:$0xff]
        %v224 = vld [vmem:[%s187 + $0x18] sm:$0xff]
        %v225 = vld [vmem:[%s187 + $0x20] sm:$0xff]
        %v226 = vld [vmem:[%s187 + $0x28] sm:$0xff]
        %v227 = vld [vmem:[%s187 + $0x30] sm:$0xff]
        %v228 = vld [vmem:[%s187 + $0x38] sm:$0xff]
        %v229 = vld [vmem:[%s187 + $0x40] sm:$0xff]
        %v230 = vld [vmem:[%s187 + $0x48] sm:$0xff]
        %v231 = vld [vmem:[%s187 + $0x50] sm:$0xff]
        %v232 = vld [vmem:[%s187 + $0x58] sm:$0xff]
        %v233 = vld [vmem:[%s187 + $0x60] sm:$0xff]
        %v234 = vld [vmem:[%s187 + $0x68] sm:$0xff]
        %v235 = vld [vmem:[%s187 + $0x70] sm:$0xff]
        %v236 = vld [vmem:[%s187 + $0x78] sm:$0xff]
        %v237 = vld [vmem:[%s187 + $0x80] sm:$0xff]
        %v238 = vld [vmem:[%s187 + $0x88] sm:$0xff]
        %v239 = vld [vmem:[%s187 + $0x90] sm:$0xff]
        %v240 = vld [vmem:[%s187 + $0x98] sm:$0xff]
        %v241 = vld [vmem:[%s187 + $0xa0] sm:$0xff]
        %v242 = vld [vmem:[%s187 + $0xa8] sm:$0xff]
        %v243 = vld [vmem:[%s187 + $0xb0] sm:$0xff]
        %v244 = vld [vmem:[%s187 + $0xb8] sm:$0xff]
        %v245 = vld [vmem:[%s208] sm:$0xff]
        %v246 = vld [vmem:[%s208 + $0x8] sm:$0xf]
        %v247 = vld [vmem:[#allocation2] sm:$0x1]
        %v272 = vunpack.c.l.b16 %v221
        %v273 = vunpack.c.h.b16 %v221
        %v274 = vunpack.c.l.b16 %v222
        %v275 = vunpack.c.h.b16 %v222
        %v276 = vunpack.c.l.b16 %v223
        %v277 = vunpack.c.h.b16 %v223
        %v278 = vunpack.c.l.b16 %v224
        %v279 = vunpack.c.h.b16 %v224
        %v280 = vunpack.c.l.b16 %v225
        %v281 = vunpack.c.h.b16 %v225
        %v282 = vunpack.c.l.b16 %v226
        %v283 = vunpack.c.h.b16 %v226
        %v284 = vunpack.c.l.b16 %v227
        %v285 = vunpack.c.h.b16 %v227
        %v286 = vunpack.c.l.b16 %v228
        %v287 = vunpack.c.h.b16 %v228
        %v288 = vunpack.c.l.b16 %v229
        %v289 = vunpack.c.h.b16 %v229
        %v290 = vunpack.c.l.b16 %v230
        %v291 = vunpack.c.h.b16 %v230
        %v292 = vunpack.c.l.b16 %v231
        %v293 = vunpack.c.h.b16 %v231
        %v294 = vunpack.c.l.b16 %v232
        %v295 = vunpack.c.h.b16 %v232
        %v296 = vunpack.c.l.b16 %v233
        %v297 = vunpack.c.h.b16 %v233
        %v298 = vunpack.c.l.b16 %v234
        %v299 = vunpack.c.h.b16 %v234
        %v300 = vunpack.c.l.b16 %v235
        %v301 = vunpack.c.h.b16 %v235
        %v302 = vunpack.c.l.b16 %v236
        %v303 = vunpack.c.h.b16 %v236
        %v304 = vunpack.c.l.b16 %v237
        %v305 = vunpack.c.h.b16 %v237
        %v306 = vunpack.c.l.b16 %v238
        %v307 = vunpack.c.h.b16 %v238
        %v308 = vunpack.c.l.b16 %v239
        %v309 = vunpack.c.h.b16 %v239
        %v310 = vunpack.c.l.b16 %v240
        %v311 = vunpack.c.h.b16 %v240
        %v312 = vunpack.c.l.b16 %v241
        %v313 = vunpack.c.h.b16 %v241
        %v314 = vunpack.c.l.b16 %v242
        %v315 = vunpack.c.h.b16 %v242
        %v316 = vunpack.c.l.b16 %v243
        %v317 = vunpack.c.h.b16 %v243
        %v318 = vunpack.c.l.b16 %v244
        %v319 = vunpack.c.h.b16 %v244
        %v320 = vpack.c.b16 %v278, %v272
        %v321 = vpack.c.b16 %v279, %v273
        %v322 = vpack.c.b16 %v280, %v274
        %v323 = vpack.c.b16 %v281, %v275
        %v324 = vpack.c.b16 %v282, %v276
        %v325 = vpack.c.b16 %v283, %v277
        %v326 = vpack.c.b16 %v290, %v284
        %v327 = vpack.c.b16 %v291, %v285
        %v328 = vpack.c.b16 %v292, %v286
        %v329 = vpack.c.b16 %v293, %v287
        %v330 = vpack.c.b16 %v294, %v288
        %v331 = vpack.c.b16 %v295, %v289
        %v332 = vpack.c.b16 %v302, %v296
        %v333 = vpack.c.b16 %v303, %v297
        %v334 = vpack.c.b16 %v304, %v298
        %v335 = vpack.c.b16 %v305, %v299
        %v336 = vpack.c.b16 %v306, %v300
        %v337 = vpack.c.b16 %v307, %v301
        %v338 = vpack.c.b16 %v314, %v308
        %v339 = vpack.c.b16 %v315, %v309
        %v340 = vpack.c.b16 %v316, %v310
        %v341 = vpack.c.b16 %v317, %v311
        %v342 = vpack.c.b16 %v318, %v312
        %v343 = vpack.c.b16 %v319, %v313
        %vm368 = vcmask 523264
        %v370 = vsel %vm368, %v247, 0
        %372 = vmatpush.bf16.msra.mxu0 0
        %373 = vmatpush.bf16.msra.mxu0 0
        %374 = vmatpush.bf16.msra.mxu0 0
        %375 = vmatpush.bf16.msra.mxu0 0
        %376 = vmatpush.bf16.msra.mxu0 %v338
        %377 = vmatpush.bf16.msra.mxu0 %v332
        %378 = vmatpush.bf16.msra.mxu0 %v326
        %379 = vmatpush.bf16.msra.mxu0 %v320
        %380 = vmatmul.bf16.gmra.mxu0 %v370
        %v381 = vpop.f32.mrf.mxu0
        %v382 = vadd.f32 0.0, %v381
        %v383 = vpop.f32.mrf.mxu0
        %384 = vdwg.mxu0
        %385 = vmatpush.bf16.msra.mxu0 0
        %386 = vmatpush.bf16.msra.mxu0 0
        %387 = vmatpush.bf16.msra.mxu0 0
        %388 = vmatpush.bf16.msra.mxu0 0
        %389 = vmatpush.bf16.msra.mxu0 %v339
        %390 = vmatpush.bf16.msra.mxu0 %v333
        %391 = vmatpush.bf16.msra.mxu0 %v327
        %392 = vmatpush.bf16.msra.mxu0 %v321
        %393 = vmatmul.bf16.gmra.mxu0 %v370
        %v394 = vpop.f32.mrf.mxu0
        %v395 = vadd.f32 0.0, %v394
        %v396 = vpop.f32.mrf.mxu0
        %397 = vdwg.mxu0
        %398 = vmatpush.bf16.msra.mxu0 0
        %399 = vmatpush.bf16.msra.mxu0 0
        %400 = vmatpush.bf16.msra.mxu0 0
        %401 = vmatpush.bf16.msra.mxu0 0
        %402 = vmatpush.bf16.msra.mxu0 %v340
        %403 = vmatpush.bf16.msra.mxu0 %v334
        %404 = vmatpush.bf16.msra.mxu0 %v328
        %405 = vmatpush.bf16.msra.mxu0 %v322
        %406 = vmatmul.bf16.gmra.mxu0 %v370
        %v407 = vpop.f32.mrf.mxu0
        %v408 = vadd.f32 0.0, %v407
        %v409 = vpop.f32.mrf.mxu0
        %410 = vdwg.mxu0
        %411 = vmatpush.bf16.msra.mxu0 0
        %412 = vmatpush.bf16.msra.mxu0 0
        %413 = vmatpush.bf16.msra.mxu0 0
        %414 = vmatpush.bf16.msra.mxu0 0
        %415 = vmatpush.bf16.msra.mxu0 %v341
        %416 = vmatpush.bf16.msra.mxu0 %v335
        %417 = vmatpush.bf16.msra.mxu0 %v329
        %418 = vmatpush.bf16.msra.mxu0 %v323
        %419 = vmatmul.bf16.gmra.mxu0 %v370
        %v420 = vpop.f32.mrf.mxu0
        %v421 = vadd.f32 0.0, %v420
        %v422 = vpop.f32.mrf.mxu0
        %423 = vdwg.mxu0
        %424 = vmatpush.bf16.msra.mxu0 0
        %425 = vmatpush.bf16.msra.mxu0 0
        %426 = vmatpush.bf16.msra.mxu0 0
        %427 = vmatpush.bf16.msra.mxu0 0
        %428 = vmatpush.bf16.msra.mxu0 %v342
        %429 = vmatpush.bf16.msra.mxu0 %v336
        %430 = vmatpush.bf16.msra.mxu0 %v330
        %431 = vmatpush.bf16.msra.mxu0 %v324
        %432 = vmatmul.bf16.gmra.mxu0 %v370
        %v433 = vpop.f32.mrf.mxu0
        %v434 = vadd.f32 0.0, %v433
        %v435 = vpop.f32.mrf.mxu0
        %436 = vdwg.mxu0
        %437 = vmatpush.bf16.msra.mxu0 0
        %438 = vmatpush.bf16.msra.mxu0 0
        %439 = vmatpush.bf16.msra.mxu0 0
        %440 = vmatpush.bf16.msra.mxu0 0
        %441 = vmatpush.bf16.msra.mxu0 %v343
        %442 = vmatpush.bf16.msra.mxu0 %v337
        %443 = vmatpush.bf16.msra.mxu0 %v331
        %444 = vmatpush.bf16.msra.mxu0 %v325
        %445 = vmatmul.bf16.gmra.mxu0 %v370
        %v446 = vpop.f32.mrf.mxu0
        %v447 = vadd.f32 0.0, %v446
        %v448 = vpop.f32.mrf.mxu0
        %449 = vdwg.mxu0
        %v456 = vrot.slane %v395, 6
        %v457 = vrot.slane %v408, 4
        %v458 = vrot.slane %v421, 2
        %v459 = vrot.slane %v447, 6
        %vm460 = vcmask 1041408
        %v461 = vsel %vm460, %v382, %v456
        %vm462 = vcmask 1045508
        %v463 = vsel %vm462, %v457, %v458
        %vm464 = vcmask 1043456
        %v465 = vsel %vm464, %v461, %v463
        %v466 = vsel %vm460, %v434, %v459
        %v469 = vadd.f32 %v245, %v465
        %v470 = vadd.f32 %v246, %v466
        %471 = vst [vmem:[%s208] sm:$0xff] %v469
        %472 = vst [vmem:[%s208 + $0x8] sm:$0xf] %v470
        %s473 = sand.u32 %s100, 1
        %s474 = scalar_lea.sflag [#allocation4], %s473
        %s475 = sand.u32 %s100, 1
        %s476 = smul.addr %s475, 12
        %s477 = scalar_lea.vmem [#allocation7], %s476
        // Predicated region
        $region41: #{tpu_custom_call.1} parent=27 // pred_check
          %p478 = pneg %p110
        $region42: #{tpu_custom_call.1} parent=27 // pred_check_branch
          %480 = sbr.rel (%p478) target = $region44
        $region43: #{tpu_custom_call.1} parent=27 // pred_region
          %482 = vsyncadd %s474, 0
          %s483 = smul.addr %s25, 6
          %s484 = smul.addr %s483, 2
          %s485 = scalar_lea.hbm %s2, %s484
          %s487 = sshll.u32 %s477, 4
          %s488 = int_to_ptr.vmem [resolvable:$true] %s487
          %s489 = sshll.u32 %s485, 4
          %s490 = int_to_ptr.hbm [resolvable:$true] %s489
          %492 = dma.vmem_to_hbm [thread:$0]  %s488, 192, %s490, %s474
        $region44: #{tpu_custom_call.1} parent=27 // pred_fallthru
          _
      $region28: #{tpu_custom_call.1} parent=5 // pred_fallthru
        _
      %p493 = scmp.le.s32.totalorder 2, %s15
      // Predicated region
      $region45: #{tpu_custom_call.1} parent=5 // pred_check
        %p494 = pneg %p493
      $region46: #{tpu_custom_call.1} parent=5 // pred_check_branch
        %496 = sbr.rel (%p494) target = $region48
      $region47: #{tpu_custom_call.1} parent=5 // pred_region
        %s497 = ssub.s32 %s15, 2
        // Predicated region
        $region49: #{tpu_custom_call.1} parent=47 // pred_check
          %p498 = pneg %p116
        $region50: #{tpu_custom_call.1} parent=47 // pred_check_branch
          %500 = sbr.rel (%p498) target = $region52
        $region51: #{tpu_custom_call.1} parent=47 // pred_region
          %s501 = sand.u32 %s101, 1
          %s502 = scalar_lea.sflag [#allocation4], %s501
          %s503 = sand.u32 %s101, 1
          %s504 = smul.addr %s503, 12
          %s505 = scalar_lea.vmem [#allocation7], %s504
          %507 = dma.done %s502, 192
        $region52: #{tpu_custom_call.1} parent=47 // pred_fallthru
          _
      $region48: #{tpu_custom_call.1} parent=5 // pred_fallthru
        _
    $region6: #{tpu_custom_call.1} parent=1 // loop_footer
      %s19 = sadd.s32 1, %s15
    $region7: #{tpu_custom_call.1} parent=1 // loop_footer_branch
      %14 = sbr.rel target = $region3
    $region8: #{tpu_custom_call.1} parent=1 // loop_exit
      _
    %508 = vsyncpa [#allocation3], 1
    %s509 = scalar_lea.sflag [#allocation3], 1
    %510 = vsyncpa %s509, 1
    %511 = vsyncpa [#allocation6], 1
    %s512 = scalar_lea.sflag [#allocation6], 1
    %513 = vsyncpa %s512, 1
    %514 = vsyncpa [#allocation4], 1
    %s515 = scalar_lea.sflag [#allocation4], 1
    %516 = vsyncpa %s515, 1

</llo_original>
